<compile_context>
chip_gen: v5e
topology: v5e:2x2
jax: 0.10.0
libtpu: 0.0.40
codegen_flags: <defaults>
</compile_context>

<pallas_src>
import functools

import jax
import jax.numpy as jnp
from jax.experimental import pallas as pl
from jax.experimental.pallas import tpu as pltpu

OUT_PAD = 128          # lane-dense fused-output width (>= 2*P + A + 2)
NUM_HEADS = 5


def _round_up(x, m):
    return (x + m - 1) // m * m


def _choose_tile(batch, block_batch):
    """Pick (TB, padded_batch). Aims for >=2 grid steps (v7x megacore) once
    the batch is big enough, capped at block_batch rows per step."""
    b8 = _round_up(max(batch, 1), 8)
    if b8 <= 16:
        tb = b8                                              # single tiny step
    else:
        tb = min(block_batch, _round_up(pl.cdiv(b8, 2), 8))  # >= 2 steps
    b_pad = _round_up(b8, tb)
    return tb, b_pad


# --------------------------------- kernel ----------------------------------

def multihead_policy_kernel(
    cls_ref,                           # [1, OUT_PAD] int32 lane classes
    state_ref,                         # [TB, state_dim] bf16
    fw1, fb1, fw2, fb2, fw3, fb3,      # trunk: W bf16 [in,out], b f32 [1,out]
    hw1, hb1,                          # fused head layer 1: [64, 5*64] bf16
    hw2, hb2,                          # fused head layer 2 (block-diag, padded)
    out_ref,                           # [TB, OUT_PAD] bf16, fused lane-dense output
):
    def mm(x, w_ref, b_ref):
        # bf16 x bf16 MXU matmul with f32 accumulation, f32 bias add.
        return (jnp.dot(x.astype(w_ref.dtype), w_ref[...],
                        preferred_element_type=jnp.float32)
                + b_ref[...])

    # Feature trunk (Dropout is identity at inference).
    x = jnp.maximum(mm(state_ref[...], fw1, fb1), 0.0)
    x = jnp.maximum(mm(x, fw2, fb2), 0.0)
    x = jnp.maximum(mm(x, fw3, fb3), 0.0)

    # All five head hidden layers in one wide matmul, then one block-diagonal
    # matmul producing the fused, lane-padded raw head outputs.
    h = jnp.maximum(mm(x, hw1, hb1), 0.0)          # [TB, 5*64]
    raw = mm(h, hw2, hb2)                          # [TB, OUT_PAD] f32

    # Lane classes: 0 = passthrough/pad, 1 = sigmoid, 2 = softmax(strategy),
    # 3 = softmax(cost).  Masks are [1, OUT_PAD] and broadcast lazily.
    cls = cls_ref[...]
    sig_mask = cls == 1
    sm1 = cls == 2
    sm2 = cls == 3
    soft_mask = cls >= 2

    neg_inf = jnp.float32(-jnp.inf)
    m1 = jnp.max(jnp.where(sm1, raw, neg_inf), axis=-1, keepdims=True)
    m2 = jnp.max(jnp.where(sm2, raw, neg_inf), axis=-1, keepdims=True)
    shift = raw - jnp.where(sm1, m1, jnp.where(sm2, m2, 0.0))
    # Softmax lanes are <= 0 after the max subtraction; clamping only guards
    # the non-softmax lanes against exp overflow (sigmoid(x>=30) ~= 1).
    e = jnp.exp(jnp.minimum(shift, 30.0))

    s1 = jnp.sum(jnp.where(sm1, e, 0.0), axis=-1, keepdims=True)
    s2 = jnp.sum(jnp.where(sm2, e, 0.0), axis=-1, keepdims=True)
    soft = e * jnp.where(sm1, 1.0 / s1, jnp.where(sm2, 1.0 / s2, 0.0))

    # On sigmoid lanes shift == raw, so sigmoid(raw) = e / (1 + e) reuses e.
    sig = e * pl.reciprocal(1.0 + e, approx=True)

    out = jnp.where(sig_mask, sig, jnp.where(soft_mask, soft, raw))
    out_ref[...] = out.astype(out_ref.dtype)


# ------------------------------ JAX wrappers --------------------------------

def init_params(key, state_dim, action_dim, num_providers, hidden_dims):
    """PyTorch-layout synthetic params: list of (W [in,out] f32, b [out] f32).

    Order: trunk layer 1..3, then for each head (provider, strategy, quality,
    cost, value): (W1 64->64, b1), (W2 64->out, b2).
    """
    layer_dims = []
    prev = state_dim
    for h in hidden_dims:
        layer_dims.append((prev, h))
        prev = h
    last = hidden_dims[-1]
    head_outs = [num_providers, action_dim, 1, num_providers, 1]
    for out in head_outs:
        layer_dims.append((prev, last))
        layer_dims.append((last, out))

    params = []
    keys = jax.random.split(key, 2 * len(layer_dims))
    for i, (din, dout) in enumerate(layer_dims):
        bound = 1.0 / jnp.sqrt(jnp.float32(din))
        w = jax.random.uniform(keys[2 * i], (din, dout), jnp.float32, -bound, bound)
        b = jax.random.uniform(keys[2 * i + 1], (dout,), jnp.float32, -bound, bound)
        params.append((w, b))
    return params


def pack_params(params, num_providers, action_dim):
    """Fuse head weights and cast weights to bf16 (biases stay f32, [1, out])."""
    P, A = num_providers, action_dim
    total = 2 * P + A + 2
    assert total <= OUT_PAD, "fused output width exceeds lane padding"

    (fw1, fb1), (fw2, fb2), (fw3, fb3) = params[:3]
    heads = params[3:]
    hdim = fw3.shape[1]                       # 64

    # Head first layers -> one [hdim, 5*hdim] matrix.
    hw1 = jnp.concatenate([heads[2 * i][0] for i in range(NUM_HEADS)], axis=1)
    hb1 = jnp.concatenate([heads[2 * i][1] for i in range(NUM_HEADS)], axis=0)

    # Head second layers -> block-diagonal [5*hdim, OUT_PAD] (zero-padded lanes).
    offs = [0, P, P + A, P + A + 1, 2 * P + A + 1]
    hw2 = jnp.zeros((NUM_HEADS * hdim, OUT_PAD), jnp.float32)
    hb2 = jnp.zeros((OUT_PAD,), jnp.float32)
    for i in range(NUM_HEADS):
        w2, b2 = heads[2 * i + 1]
        dout = w2.shape[1]
        hw2 = hw2.at[i * hdim:(i + 1) * hdim, offs[i]:offs[i] + dout].set(w2)
        hb2 = hb2.at[offs[i]:offs[i] + dout].set(b2)

    def W(w):
        return w.astype(jnp.bfloat16)

    def B(b):
        return b.reshape(1, -1).astype(jnp.float32)

    return (W(fw1), B(fb1), W(fw2), B(fb2), W(fw3), B(fb3),
            W(hw1), B(hb1), W(hw2), B(hb2))


def build_lane_class(num_providers, action_dim):
    """[1, OUT_PAD] int32: 0 = passthrough/pad, 1 = sigmoid, 2/3 = softmax groups."""
    P, A = num_providers, action_dim
    cls = jnp.zeros((OUT_PAD,), jnp.int32)
    cls = cls.at[0:P].set(1)                              # provider -> sigmoid
    cls = cls.at[P:P + A].set(2)                          # strategy -> softmax
    cls = cls.at[P + A:P + A + 1].set(1)                  # quality  -> sigmoid
    cls = cls.at[P + A + 1:2 * P + A + 1].set(3)          # cost     -> softmax
    # value lane (2P+A+1) and padding stay class 0 (identity / zero)
    return cls.reshape(1, OUT_PAD)


def multihead_forward(state, packed, lane_cls, *, num_providers, action_dim,
                      block_batch=512):
    B, state_dim = state.shape
    TB, B_pad = _choose_tile(B, block_batch)

    state_bf16 = state.astype(jnp.bfloat16)
    if B_pad != B:
        state_bf16 = jnp.pad(state_bf16, ((0, B_pad - B), (0, 0)))

    grid = (B_pad // TB,)

    def const_spec(arr):
        return pl.BlockSpec(arr.shape, lambda i: (0, 0))

    in_specs = ([const_spec(lane_cls),
                 pl.BlockSpec((TB, state_dim), lambda i: (i, 0))]
                + [const_spec(a) for a in packed])
    out_specs = pl.BlockSpec((TB, OUT_PAD), lambda i: (i, 0))

    weights = packed[0::2]
    matmul_flops = 2 * B_pad * sum(int(w.shape[0]) * int(w.shape[1]) for w in weights)
    bytes_accessed = (state_bf16.size * 2
                      + lane_cls.size * 4
                      + sum(int(p.size) * p.dtype.itemsize for p in packed)
                      + B_pad * OUT_PAD * 2)
    cost = pl.CostEstimate(flops=matmul_flops,
                           transcendentals=2 * B_pad * OUT_PAD,
                           bytes_accessed=int(bytes_accessed))

    fused = pl.pallas_call(
        multihead_policy_kernel,
        out_shape=jax.ShapeDtypeStruct((B_pad, OUT_PAD), jnp.bfloat16),
        grid=grid,
        in_specs=in_specs,
        out_specs=out_specs,
        compiler_params=pltpu.CompilerParams(
            dimension_semantics=("parallel",)),
        cost_estimate=cost,
    )(lane_cls, state_bf16, *packed)

    fused = fused[:B].astype(jnp.float32)
    P, A = num_providers, action_dim
    provider_probs = fused[:, 0:P]
    strategy_probs = fused[:, P:P + A]
    quality_threshold = fused[:, P + A:P + A + 1]
    cost_allocation = fused[:, P + A + 1:2 * P + A + 1]
    state_value = fused[:, 2 * P + A + 1:2 * P + A + 2]
    return provider_probs, strategy_probs, quality_threshold, cost_allocation, state_value


# Pure-JAX reference with matching precision (bf16-rounded weights AND
# activations feeding each matmul, f32 accumulation / nonlinearities).
def reference_forward(state, params, num_providers, action_dim):
    def q(a):
        return a.astype(jnp.bfloat16).astype(jnp.float32)

    def lin(x, w, b):
        return q(x) @ q(w) + b

    x = state
    for (w, b) in params[:3]:
        x = jnp.maximum(lin(x, w, b), 0.0)

    def head(i):
        (w1, b1), (w2, b2) = params[3 + 2 * i], params[4 + 2 * i]
        return lin(jnp.maximum(lin(x, w1, b1), 0.0), w2, b2)

    return (
        jax.nn.sigmoid(head(0)),
        jax.nn.softmax(head(1), axis=-1),
        jax.nn.sigmoid(head(2)),
        jax.nn.softmax(head(3), axis=-1),
        head(4),
    )


if __name__ == "__main__":
    batch = 2
    state_dim = 32
    action_dim = 8
    num_providers = 5
    hidden_dims = [256, 128, 64]

    key = jax.random.PRNGKey(0)
    k_state, k_params = jax.random.split(key)

    state = jax.random.normal(k_state, (batch, state_dim), jnp.float32)
    params = init_params(k_params, state_dim, action_dim, num_providers, hidden_dims)
    packed = pack_params(params, num_providers, action_dim)
    lane_cls = build_lane_class(num_providers, action_dim)

    # TODO(synk): nn.Dropout is modeled as identity (inference mode only).
    fwd = jax.jit(functools.partial(
        multihead_forward, num_providers=num_providers, action_dim=action_dim))
    outs = jax.block_until_ready(fwd(state, packed, lane_cls))

    refs = reference_forward(state, params, num_providers, action_dim)
    # bf16 weights/activations/output + approx reciprocal -> loosened tolerance.
    for o, r in zip(outs, refs):
        assert o.shape == r.shape, (o.shape, r.shape)
        assert jnp.max(jnp.abs(o - r)) < 2e-2, float(jnp.max(jnp.abs(o - r)))

    print("KERNEL_OK")
</pallas_src>

<mosaic_0001>
module attributes {stable_mosaic.version = 11 : i64} {
  func.func @multihead_policy_kernel(%arg0: i32, %arg1: memref<1x128xi32, #tpu.memory_space<vmem>>, %arg2: memref<8x32xbf16, #tpu.memory_space<vmem>>, %arg3: memref<32x256xbf16, #tpu.memory_space<vmem>>, %arg4: memref<1x256xf32, #tpu.memory_space<vmem>>, %arg5: memref<256x128xbf16, #tpu.memory_space<vmem>>, %arg6: memref<1x128xf32, #tpu.memory_space<vmem>>, %arg7: memref<128x64xbf16, #tpu.memory_space<vmem>>, %arg8: memref<1x64xf32, #tpu.memory_space<vmem>>, %arg9: memref<64x320xbf16, #tpu.memory_space<vmem>>, %arg10: memref<1x320xf32, #tpu.memory_space<vmem>>, %arg11: memref<320x128xbf16, #tpu.memory_space<vmem>>, %arg12: memref<1x128xf32, #tpu.memory_space<vmem>>, %arg13: memref<8x128xbf16, #tpu.memory_space<vmem>>) attributes {dimension_semantics = [#tpu.dimension_semantics<parallel>], iteration_bounds = array<i64: 1>, scalar_prefetch = 0 : i64, scratch_operands = 0 : i64, tpu.core_type = #tpu.core_type<tc>, window_params = [{pipeline_mode = #tpu.pipeline_mode<synchronous>, transform_indices = @transform_0, window_bounds = array<i64: 1, 128>}, {transform_indices = @transform_1, window_bounds = array<i64: 8, 32>}, {pipeline_mode = #tpu.pipeline_mode<synchronous>, transform_indices = @transform_2, window_bounds = array<i64: 32, 256>}, {pipeline_mode = #tpu.pipeline_mode<synchronous>, transform_indices = @transform_3, window_bounds = array<i64: 1, 256>}, {pipeline_mode = #tpu.pipeline_mode<synchronous>, transform_indices = @transform_4, window_bounds = array<i64: 256, 128>}, {pipeline_mode = #tpu.pipeline_mode<synchronous>, transform_indices = @transform_5, window_bounds = array<i64: 1, 128>}, {pipeline_mode = #tpu.pipeline_mode<synchronous>, transform_indices = @transform_6, window_bounds = array<i64: 128, 64>}, {pipeline_mode = #tpu.pipeline_mode<synchronous>, transform_indices = @transform_7, window_bounds = array<i64: 1, 64>}, {pipeline_mode = #tpu.pipeline_mode<synchronous>, transform_indices = @transform_8, window_bounds = array<i64: 64, 320>}, {pipeline_mode = #tpu.pipeline_mode<synchronous>, transform_indices = @transform_9, window_bounds = array<i64: 1, 320>}, {pipeline_mode = #tpu.pipeline_mode<synchronous>, transform_indices = @transform_10, window_bounds = array<i64: 320, 128>}, {pipeline_mode = #tpu.pipeline_mode<synchronous>, transform_indices = @transform_11, window_bounds = array<i64: 1, 128>}, {transform_indices = @transform_12, window_bounds = array<i64: 8, 128>}]} {
    %c0 = arith.constant 0 : index
    %c0_0 = arith.constant 0 : index
    %0 = vector.load %arg2[%c0, %c0_0] : memref<8x32xbf16, #tpu.memory_space<vmem>>, vector<8x32xbf16>
    %c0_1 = arith.constant 0 : index
    %c0_2 = arith.constant 0 : index
    %1 = vector.load %arg3[%c0_1, %c0_2] : memref<32x256xbf16, #tpu.memory_space<vmem>>, vector<32x256xbf16>
    %cst = arith.constant dense<0.000000e+00> : vector<8x256xf32>
    %2 = tpu.matmul %0, %1, %cst {dimension_numbers = #tpu.dot_dimension_numbers<[1], [0], [0], [1], [0, 0, 1, 1], [], []>} : vector<8x32xbf16>, vector<32x256xbf16>, vector<8x256xf32> -> vector<8x256xf32>
    %c0_3 = arith.constant 0 : index
    %c0_4 = arith.constant 0 : index
    %3 = vector.load %arg4[%c0_3, %c0_4] : memref<1x256xf32, #tpu.memory_space<vmem>>, vector<1x256xf32>
    %4 = vector.broadcast %3 : vector<1x256xf32> to vector<8x256xf32>
    %5 = arith.addf %2, %4 : vector<8x256xf32>
    %cst_5 = arith.constant 0.000000e+00 : f32
    %6 = vector.broadcast %cst_5 : f32 to vector<8x256xf32>
    %7 = arith.maximumf %5, %6 : vector<8x256xf32>
    %8 = arith.truncf %7 : vector<8x256xf32> to vector<8x256xbf16>
    %c0_6 = arith.constant 0 : index
    %c0_7 = arith.constant 0 : index
    %9 = vector.load %arg5[%c0_6, %c0_7] : memref<256x128xbf16, #tpu.memory_space<vmem>>, vector<256x128xbf16>
    %cst_8 = arith.constant dense<0.000000e+00> : vector<8x128xf32>
    %10 = tpu.matmul %8, %9, %cst_8 {dimension_numbers = #tpu.dot_dimension_numbers<[1], [0], [0], [1], [0, 0, 1, 1], [], []>} : vector<8x256xbf16>, vector<256x128xbf16>, vector<8x128xf32> -> vector<8x128xf32>
    %c0_9 = arith.constant 0 : index
    %c0_10 = arith.constant 0 : index
    %11 = vector.load %arg6[%c0_9, %c0_10] : memref<1x128xf32, #tpu.memory_space<vmem>>, vector<1x128xf32>
    %12 = vector.broadcast %11 : vector<1x128xf32> to vector<8x128xf32>
    %13 = arith.addf %10, %12 : vector<8x128xf32>
    %cst_11 = arith.constant 0.000000e+00 : f32
    %14 = vector.broadcast %cst_11 : f32 to vector<8x128xf32>
    %15 = arith.maximumf %13, %14 : vector<8x128xf32>
    %16 = arith.truncf %15 : vector<8x128xf32> to vector<8x128xbf16>
    %c0_12 = arith.constant 0 : index
    %c0_13 = arith.constant 0 : index
    %17 = vector.load %arg7[%c0_12, %c0_13] : memref<128x64xbf16, #tpu.memory_space<vmem>>, vector<128x64xbf16>
    %cst_14 = arith.constant dense<0.000000e+00> : vector<8x64xf32>
    %18 = tpu.matmul %16, %17, %cst_14 {dimension_numbers = #tpu.dot_dimension_numbers<[1], [0], [0], [1], [0, 0, 1, 1], [], []>} : vector<8x128xbf16>, vector<128x64xbf16>, vector<8x64xf32> -> vector<8x64xf32>
    %c0_15 = arith.constant 0 : index
    %c0_16 = arith.constant 0 : index
    %19 = vector.load %arg8[%c0_15, %c0_16] : memref<1x64xf32, #tpu.memory_space<vmem>>, vector<1x64xf32>
    %20 = vector.broadcast %19 : vector<1x64xf32> to vector<8x64xf32>
    %21 = arith.addf %18, %20 : vector<8x64xf32>
    %cst_17 = arith.constant 0.000000e+00 : f32
    %22 = vector.broadcast %cst_17 : f32 to vector<8x64xf32>
    %23 = arith.maximumf %21, %22 : vector<8x64xf32>
    %24 = arith.truncf %23 : vector<8x64xf32> to vector<8x64xbf16>
    %c0_18 = arith.constant 0 : index
    %c0_19 = arith.constant 0 : index
    %25 = vector.load %arg9[%c0_18, %c0_19] : memref<64x320xbf16, #tpu.memory_space<vmem>>, vector<64x320xbf16>
    %cst_20 = arith.constant dense<0.000000e+00> : vector<8x320xf32>
    %26 = tpu.matmul %24, %25, %cst_20 {dimension_numbers = #tpu.dot_dimension_numbers<[1], [0], [0], [1], [0, 0, 1, 1], [], []>} : vector<8x64xbf16>, vector<64x320xbf16>, vector<8x320xf32> -> vector<8x320xf32>
    %c0_21 = arith.constant 0 : index
    %c0_22 = arith.constant 0 : index
    %27 = vector.load %arg10[%c0_21, %c0_22] : memref<1x320xf32, #tpu.memory_space<vmem>>, vector<1x320xf32>
    %28 = vector.broadcast %27 : vector<1x320xf32> to vector<8x320xf32>
    %29 = arith.addf %26, %28 : vector<8x320xf32>
    %cst_23 = arith.constant 0.000000e+00 : f32
    %30 = vector.broadcast %cst_23 : f32 to vector<8x320xf32>
    %31 = arith.maximumf %29, %30 : vector<8x320xf32>
    %32 = arith.truncf %31 : vector<8x320xf32> to vector<8x320xbf16>
    %c0_24 = arith.constant 0 : index
    %c0_25 = arith.constant 0 : index
    %33 = vector.load %arg11[%c0_24, %c0_25] : memref<320x128xbf16, #tpu.memory_space<vmem>>, vector<320x128xbf16>
    %cst_26 = arith.constant dense<0.000000e+00> : vector<8x128xf32>
    %34 = tpu.matmul %32, %33, %cst_26 {dimension_numbers = #tpu.dot_dimension_numbers<[1], [0], [0], [1], [0, 0, 1, 1], [], []>} : vector<8x320xbf16>, vector<320x128xbf16>, vector<8x128xf32> -> vector<8x128xf32>
    %c0_27 = arith.constant 0 : index
    %c0_28 = arith.constant 0 : index
    %35 = vector.load %arg12[%c0_27, %c0_28] : memref<1x128xf32, #tpu.memory_space<vmem>>, vector<1x128xf32>
    %36 = vector.broadcast %35 : vector<1x128xf32> to vector<8x128xf32>
    %37 = arith.addf %34, %36 : vector<8x128xf32>
    %c0_29 = arith.constant 0 : index
    %c0_30 = arith.constant 0 : index
    %38 = vector.load %arg1[%c0_29, %c0_30] : memref<1x128xi32, #tpu.memory_space<vmem>>, vector<1x128xi32>
    %c1_i32 = arith.constant 1 : i32
    %39 = vector.broadcast %c1_i32 : i32 to vector<1x128xi32>
    %40 = arith.cmpi eq, %38, %39 : vector<1x128xi32>
    %c2_i32 = arith.constant 2 : i32
    %41 = vector.broadcast %c2_i32 : i32 to vector<1x128xi32>
    %42 = arith.cmpi eq, %38, %41 : vector<1x128xi32>
    %c3_i32 = arith.constant 3 : i32
    %43 = vector.broadcast %c3_i32 : i32 to vector<1x128xi32>
    %44 = arith.cmpi eq, %38, %43 : vector<1x128xi32>
    %c2_i32_31 = arith.constant 2 : i32
    %45 = vector.broadcast %c2_i32_31 : i32 to vector<1x128xi32>
    %46 = arith.cmpi sge, %38, %45 : vector<1x128xi32>
    %cst_32 = arith.constant 0xFF800000 : f32
    %47 = vector.shape_cast %42 : vector<1x128xi1> to vector<1x128xi1>
    %48 = vector.broadcast %47 : vector<1x128xi1> to vector<8x128xi1>
    %49 = vector.broadcast %cst_32 : f32 to vector<8x128xf32>
    %50 = arith.select %48, %37, %49 : vector<8x128xi1>, vector<8x128xf32>
    %cst_33 = arith.constant dense<0xFF800000> : vector<8xf32>
    %51 = vector.multi_reduction <maximumf>, %50, %cst_33 [1] : vector<8x128xf32> to vector<8xf32>
    %52 = vector.shape_cast %51 : vector<8xf32> to vector<8x1xf32>
    %cst_34 = arith.constant 0xFF800000 : f32
    %53 = vector.shape_cast %44 : vector<1x128xi1> to vector<1x128xi1>
    %54 = vector.broadcast %53 : vector<1x128xi1> to vector<8x128xi1>
    %55 = vector.broadcast %cst_34 : f32 to vector<8x128xf32>
    %56 = arith.select %54, %37, %55 : vector<8x128xi1>, vector<8x128xf32>
    %cst_35 = arith.constant dense<0xFF800000> : vector<8xf32>
    %57 = vector.multi_reduction <maximumf>, %56, %cst_35 [1] : vector<8x128xf32> to vector<8xf32>
    %58 = vector.shape_cast %57 : vector<8xf32> to vector<8x1xf32>
    %cst_36 = arith.constant 0.000000e+00 : f32
    %59 = vector.shape_cast %44 : vector<1x128xi1> to vector<1x128xi1>
    %60 = vector.broadcast %59 : vector<1x128xi1> to vector<8x128xi1>
    %61 = vector.shape_cast %58 : vector<8x1xf32> to vector<8x1xf32>
    %62 = vector.broadcast %61 : vector<8x1xf32> to vector<8x128xf32>
    %63 = vector.broadcast %cst_36 : f32 to vector<8x128xf32>
    %64 = arith.select %60, %62, %63 : vector<8x128xi1>, vector<8x128xf32>
    %65 = vector.shape_cast %42 : vector<1x128xi1> to vector<1x128xi1>
    %66 = vector.broadcast %65 : vector<1x128xi1> to vector<8x128xi1>
    %67 = vector.shape_cast %52 : vector<8x1xf32> to vector<8x1xf32>
    %68 = vector.broadcast %67 : vector<8x1xf32> to vector<8x128xf32>
    %69 = arith.select %66, %68, %64 : vector<8x128xi1>, vector<8x128xf32>
    %70 = arith.subf %37, %69 : vector<8x128xf32>
    %cst_37 = arith.constant 3.000000e+01 : f32
    %71 = vector.broadcast %cst_37 : f32 to vector<8x128xf32>
    %72 = arith.minimumf %70, %71 : vector<8x128xf32>
    %73 = math.exp %72 : vector<8x128xf32>
    %cst_38 = arith.constant 0.000000e+00 : f32
    %74 = vector.shape_cast %42 : vector<1x128xi1> to vector<1x128xi1>
    %75 = vector.broadcast %74 : vector<1x128xi1> to vector<8x128xi1>
    %76 = vector.broadcast %cst_38 : f32 to vector<8x128xf32>
    %77 = arith.select %75, %73, %76 : vector<8x128xi1>, vector<8x128xf32>
    %cst_39 = arith.constant dense<0.000000e+00> : vector<8xf32>
    %78 = vector.multi_reduction <add>, %77, %cst_39 [1] : vector<8x128xf32> to vector<8xf32>
    %79 = vector.shape_cast %78 : vector<8xf32> to vector<8x1xf32>
    %cst_40 = arith.constant 0.000000e+00 : f32
    %80 = vector.shape_cast %44 : vector<1x128xi1> to vector<1x128xi1>
    %81 = vector.broadcast %80 : vector<1x128xi1> to vector<8x128xi1>
    %82 = vector.broadcast %cst_40 : f32 to vector<8x128xf32>
    %83 = arith.select %81, %73, %82 : vector<8x128xi1>, vector<8x128xf32>
    %cst_41 = arith.constant dense<0.000000e+00> : vector<8xf32>
    %84 = vector.multi_reduction <add>, %83, %cst_41 [1] : vector<8x128xf32> to vector<8xf32>
    %85 = vector.shape_cast %84 : vector<8xf32> to vector<8x1xf32>
    %cst_42 = arith.constant 1.000000e+00 : f32
    %86 = vector.broadcast %cst_42 : f32 to vector<8x1xf32>
    %87 = arith.divf %86, %79 : vector<8x1xf32>
    %cst_43 = arith.constant 1.000000e+00 : f32
    %88 = vector.broadcast %cst_43 : f32 to vector<8x1xf32>
    %89 = arith.divf %88, %85 : vector<8x1xf32>
    %cst_44 = arith.constant 0.000000e+00 : f32
    %90 = vector.shape_cast %44 : vector<1x128xi1> to vector<1x128xi1>
    %91 = vector.broadcast %90 : vector<1x128xi1> to vector<8x128xi1>
    %92 = vector.shape_cast %89 : vector<8x1xf32> to vector<8x1xf32>
    %93 = vector.broadcast %92 : vector<8x1xf32> to vector<8x128xf32>
    %94 = vector.broadcast %cst_44 : f32 to vector<8x128xf32>
    %95 = arith.select %91, %93, %94 : vector<8x128xi1>, vector<8x128xf32>
    %96 = vector.shape_cast %42 : vector<1x128xi1> to vector<1x128xi1>
    %97 = vector.broadcast %96 : vector<1x128xi1> to vector<8x128xi1>
    %98 = vector.shape_cast %87 : vector<8x1xf32> to vector<8x1xf32>
    %99 = vector.broadcast %98 : vector<8x1xf32> to vector<8x128xf32>
    %100 = arith.select %97, %99, %95 : vector<8x128xi1>, vector<8x128xf32>
    %101 = arith.mulf %73, %100 : vector<8x128xf32>
    %cst_45 = arith.constant 1.000000e+00 : f32
    %102 = vector.broadcast %cst_45 : f32 to vector<8x128xf32>
    %103 = arith.addf %102, %73 : vector<8x128xf32>
    %104 = tpu.reciprocal %103 {approx = true} : vector<8x128xf32> -> vector<8x128xf32>
    %105 = arith.mulf %73, %104 : vector<8x128xf32>
    %106 = vector.shape_cast %46 : vector<1x128xi1> to vector<1x128xi1>
    %107 = vector.broadcast %106 : vector<1x128xi1> to vector<8x128xi1>
    %108 = arith.select %107, %101, %37 : vector<8x128xi1>, vector<8x128xf32>
    %109 = vector.shape_cast %40 : vector<1x128xi1> to vector<1x128xi1>
    %110 = vector.broadcast %109 : vector<1x128xi1> to vector<8x128xi1>
    %111 = arith.select %110, %105, %108 : vector<8x128xi1>, vector<8x128xf32>
    %112 = arith.truncf %111 : vector<8x128xf32> to vector<8x128xbf16>
    %c0_46 = arith.constant 0 : index
    %c0_47 = arith.constant 0 : index
    %113 = vector.load %arg13[%c0_46, %c0_47] : memref<8x128xbf16, #tpu.memory_space<vmem>>, vector<8x128xbf16>
    tpu.vector_store %arg13[%c0_46, %c0_47], %112 {strides = array<i32>} : memref<8x128xbf16, #tpu.memory_space<vmem>>, vector<8x128xbf16>,
    return
  }
  func.func @transform_0(%arg0: i32) -> (i32, i32) {
    %c0_i32 = arith.constant 0 : i32
    %c0_i32_0 = arith.constant 0 : i32
    %c0_i32_1 = arith.constant 0 : i32
    return %c0_i32, %c0_i32_0 : i32, i32
  }
  func.func @transform_1(%arg0: i32) -> (i32, i32) {
    %c0_i32 = arith.constant 0 : i32
    %c0_i32_0 = arith.constant 0 : i32
    return %arg0, %c0_i32 : i32, i32
  }
  func.func @transform_2(%arg0: i32) -> (i32, i32) {
    %c0_i32 = arith.constant 0 : i32
    %c0_i32_0 = arith.constant 0 : i32
    %c0_i32_1 = arith.constant 0 : i32
    return %c0_i32, %c0_i32_0 : i32, i32
  }
  func.func @transform_3(%arg0: i32) -> (i32, i32) {
    %c0_i32 = arith.constant 0 : i32
    %c0_i32_0 = arith.constant 0 : i32
    %c0_i32_1 = arith.constant 0 : i32
    return %c0_i32, %c0_i32_0 : i32, i32
  }
  func.func @transform_4(%arg0: i32) -> (i32, i32) {
    %c0_i32 = arith.constant 0 : i32
    %c0_i32_0 = arith.constant 0 : i32
    %c0_i32_1 = arith.constant 0 : i32
    return %c0_i32, %c0_i32_0 : i32, i32
  }
  func.func @transform_5(%arg0: i32) -> (i32, i32) {
    %c0_i32 = arith.constant 0 : i32
    %c0_i32_0 = arith.constant 0 : i32
    %c0_i32_1 = arith.constant 0 : i32
    return %c0_i32, %c0_i32_0 : i32, i32
  }
  func.func @transform_6(%arg0: i32) -> (i32, i32) {
    %c0_i32 = arith.constant 0 : i32
    %c0_i32_0 = arith.constant 0 : i32
    %c0_i32_1 = arith.constant 0 : i32
    return %c0_i32, %c0_i32_0 : i32, i32
  }
  func.func @transform_7(%arg0: i32) -> (i32, i32) {
    %c0_i32 = arith.constant 0 : i32
    %c0_i32_0 = arith.constant 0 : i32
    %c0_i32_1 = arith.constant 0 : i32
    return %c0_i32, %c0_i32_0 : i32, i32
  }
  func.func @transform_8(%arg0: i32) -> (i32, i32) {
    %c0_i32 = arith.constant 0 : i32
    %c0_i32_0 = arith.constant 0 : i32
    %c0_i32_1 = arith.constant 0 : i32
    return %c0_i32, %c0_i32_0 : i32, i32
  }
  func.func @transform_9(%arg0: i32) -> (i32, i32) {
    %c0_i32 = arith.constant 0 : i32
    %c0_i32_0 = arith.constant 0 : i32
    %c0_i32_1 = arith.constant 0 : i32
    return %c0_i32, %c0_i32_0 : i32, i32
  }
  func.func @transform_10(%arg0: i32) -> (i32, i32) {
    %c0_i32 = arith.constant 0 : i32
    %c0_i32_0 = arith.constant 0 : i32
    %c0_i32_1 = arith.constant 0 : i32
    return %c0_i32, %c0_i32_0 : i32, i32
  }
  func.func @transform_11(%arg0: i32) -> (i32, i32) {
    %c0_i32 = arith.constant 0 : i32
    %c0_i32_0 = arith.constant 0 : i32
    %c0_i32_1 = arith.constant 0 : i32
    return %c0_i32, %c0_i32_0 : i32, i32
  }
  func.func @transform_12(%arg0: i32) -> (i32, i32) {
    %c0_i32 = arith.constant 0 : i32
    %c0_i32_0 = arith.constant 0 : i32
    return %arg0, %c0_i32 : i32, i32
  }
}

</mosaic_0001>

<llo_original>
// kernel: multihead_forward.1
$region0: #{multihead_forward.1}
  #allocation0 [shape = 'u32[]', space=smem, size = 0x4, offset = 0x4, fixed_abs, tag = 'smem constant byte address 0x4 - core index']
  #allocation1 [shape = 'u32[72,128]{1,0:T(1,128)}', space=vmem, size = 0x9000, scoped, tag = 'internal scratch']
  %s0 = inlined_call_operand.vmem [shape: s32[1,128], index: 0, kind: input, shape index: {}]
  %s1 = inlined_call_operand.vmem [shape: bf16[8,32], index: 1, kind: input, shape index: {}]
  %s2 = inlined_call_operand.hbm [shape: bf16[32,256], index: 2, kind: input, shape index: {}]
  %s3 = inlined_call_operand.vmem [shape: f32[1,256], index: 3, kind: input, shape index: {}]
  %s4 = inlined_call_operand.hbm [shape: bf16[256,128], index: 4, kind: input, shape index: {}]
  %s5 = inlined_call_operand.vmem [shape: f32[1,128], index: 5, kind: input, shape index: {}]
  %s6 = inlined_call_operand.vmem [shape: bf16[128,64], index: 6, kind: input, shape index: {}]
  %s7 = inlined_call_operand.vmem [shape: f32[1,64], index: 7, kind: input, shape index: {}]
  %s8 = inlined_call_operand.vmem [shape: bf16[64,320], index: 8, kind: input, shape index: {}]
  %s9 = inlined_call_operand.vmem [shape: f32[1,320], index: 9, kind: input, shape index: {}]
  %s10 = inlined_call_operand.hbm [shape: bf16[320,128], index: 10, kind: input, shape index: {}]
  %s11 = inlined_call_operand.vmem [shape: f32[1,128], index: 11, kind: input, shape index: {}]
  %s12 = inlined_call_operand.vmem [shape: bf16[8,128], index: 12, kind: output, shape index: {}]
  %s13 = sld [smem:[#allocation0]]
  $region70: #{multihead_forward.1} parent=0
    _
  %s15 = ssub.s32 1, %s13
  %s16 = scalar_select 0, %s15, %s13
  $region1: #{multihead_forward.1} parent=0
    #allocation2 [shape = 'u8[16384]{0}', space=vmem, size = 0x4000, scoped, tag = 'input window, operand 2, single buffered']
    #allocation3 [shape = 's32[1]{0}', space=sflag, size = 0x4, scoped, tag = 'scoped memory for multihead_forward.1']
    #allocation4 [shape = 'u8[65536]{0}', space=vmem, size = 0x10000, scoped, tag = 'input window, operand 4, single buffered']
    #allocation5 [shape = 's32[1]{0}', space=sflag, size = 0x4, scoped, tag = 'scoped memory for multihead_forward.1']
    #allocation6 [shape = 'u8[81920]{0}', space=vmem, size = 0x14000, scoped, tag = 'input window, operand 10, single buffered']
    %17 = vsyncpa [#allocation3], 0
    %18 = vsyncpa [#allocation5], 0
    // Predicated region
    $region2: #{multihead_forward.1} parent=1 // pred_check
      _
    $region3: #{multihead_forward.1} parent=1 // pred_check_branch
      %20 = sbr.rel (0) target = $region5
    $region4: #{multihead_forward.1} parent=1 // pred_region
      _
    $region5: #{multihead_forward.1} parent=1 // pred_fallthru
      _
    // Predicated region
    $region6: #{multihead_forward.1} parent=1 // pred_check
      _
    $region7: #{multihead_forward.1} parent=1 // pred_check_branch
      %22 = sbr.rel (0) target = $region9
    $region8: #{multihead_forward.1} parent=1 // pred_region
      _
    $region9: #{multihead_forward.1} parent=1 // pred_fallthru
      _
    // Predicated region
    $region10: #{multihead_forward.1} parent=1 // pred_check
      _
    $region11: #{multihead_forward.1} parent=1 // pred_check_branch
      %24 = sbr.rel (0) target = $region13
    $region12: #{multihead_forward.1} parent=1 // pred_region
      %26 = vsyncadd [#allocation3], 0
      %s27 = sshll.u32 %s2, 4
      %s28 = int_to_ptr.hbm [resolvable:$true] %s27
      %s29 = sshll.u32 [#allocation2], 4
      %s30 = int_to_ptr.vmem [resolvable:$true] %s29
      %35 = dma.hbm_to_vmem [thread:$0]  %s28, 512, %s30, [#allocation3], 128, 128, 8
    $region13: #{multihead_forward.1} parent=1 // pred_fallthru
      _
    // Predicated region
    $region14: #{multihead_forward.1} parent=1 // pred_check
      _
    $region15: #{multihead_forward.1} parent=1 // pred_check_branch
      %37 = sbr.rel (0) target = $region17
    $region16: #{multihead_forward.1} parent=1 // pred_region
      _
    $region17: #{multihead_forward.1} parent=1 // pred_fallthru
      _
    // Predicated region
    $region18: #{multihead_forward.1} parent=1 // pred_check
      _
    $region19: #{multihead_forward.1} parent=1 // pred_check_branch
      %39 = sbr.rel (0) target = $region21
    $region20: #{multihead_forward.1} parent=1 // pred_region
      %41 = vsyncadd [#allocation5], 0
      %s42 = sshll.u32 %s4, 4
      %s43 = int_to_ptr.hbm [resolvable:$true] %s42
      %s44 = sshll.u32 [#allocation4], 4
      %s45 = int_to_ptr.vmem [resolvable:$true] %s44
      %50 = dma.hbm_to_vmem [thread:$0]  %s43, 2048, %s45, [#allocation5], 64, 64, 4
    $region21: #{multihead_forward.1} parent=1 // pred_fallthru
      _
    // Predicated region
    $region22: #{multihead_forward.1} parent=1 // pred_check
      _
    $region23: #{multihead_forward.1} parent=1 // pred_check_branch
      %52 = sbr.rel (0) target = $region25
    $region24: #{multihead_forward.1} parent=1 // pred_region
      _
    $region25: #{multihead_forward.1} parent=1 // pred_fallthru
      _
    // Predicated region
    $region26: #{multihead_forward.1} parent=1 // pred_check
      _
    $region27: #{multihead_forward.1} parent=1 // pred_check_branch
      %54 = sbr.rel (0) target = $region29
    $region28: #{multihead_forward.1} parent=1 // pred_region
      _
    $region29: #{multihead_forward.1} parent=1 // pred_fallthru
      _
    // Predicated region
    $region30: #{multihead_forward.1} parent=1 // pred_check
      _
    $region31: #{multihead_forward.1} parent=1 // pred_check_branch
      %56 = sbr.rel (0) target = $region33
    $region32: #{multihead_forward.1} parent=1 // pred_region
      _
    $region33: #{multihead_forward.1} parent=1 // pred_fallthru
      _
    // Predicated region
    $region34: #{multihead_forward.1} parent=1 // pred_check
      _
    $region35: #{multihead_forward.1} parent=1 // pred_check_branch
      %58 = sbr.rel (0) target = $region37
    $region36: #{multihead_forward.1} parent=1 // pred_region
      _
    $region37: #{multihead_forward.1} parent=1 // pred_fallthru
      _
    // Predicated region
    $region38: #{multihead_forward.1} parent=1 // pred_check
      _
    $region39: #{multihead_forward.1} parent=1 // pred_check_branch
      %60 = sbr.rel (0) target = $region41
    $region40: #{multihead_forward.1} parent=1 // pred_region
      _
    $region41: #{multihead_forward.1} parent=1 // pred_fallthru
      _
    // Predicated region
    $region42: #{multihead_forward.1} parent=1 // pred_check
      _
    $region43: #{multihead_forward.1} parent=1 // pred_check_branch
      %62 = sbr.rel (0) target = $region45
    $region44: #{multihead_forward.1} parent=1 // pred_region
      %64 = vsyncadd [#allocation5], 0
      %s65 = sshll.u32 %s10, 4
      %s66 = int_to_ptr.hbm [resolvable:$true] %s65
      %s67 = sshll.u32 [#allocation6], 4
      %s68 = int_to_ptr.vmem [resolvable:$true] %s67
      %73 = dma.hbm_to_vmem [thread:$0]  %s66, 2560, %s68, [#allocation5], 64, 64, 4
    $region45: #{multihead_forward.1} parent=1 // pred_fallthru
      _
    // Predicated region
    $region46: #{multihead_forward.1} parent=1 // pred_check
      _
    $region47: #{multihead_forward.1} parent=1 // pred_check_branch
      %75 = sbr.rel (0) target = $region49
    $region48: #{multihead_forward.1} parent=1 // pred_region
      _
    $region49: #{multihead_forward.1} parent=1 // pred_fallthru
      _
    // Predicated region
    $region50: #{multihead_forward.1} parent=1 // pred_check
      _
    $region51: #{multihead_forward.1} parent=1 // pred_check_branch
      %77 = sbr.rel (0) target = $region53
    $region52: #{multihead_forward.1} parent=1 // pred_region
      %79 = dma.done [#allocation3], 512
    $region53: #{multihead_forward.1} parent=1 // pred_fallthru
      _
    // Predicated region
    $region54: #{multihead_forward.1} parent=1 // pred_check
      _
    $region55: #{multihead_forward.1} parent=1 // pred_check_branch
      %81 = sbr.rel (0) target = $region57
    $region56: #{multihead_forward.1} parent=1 // pred_region
      %83 = dma.done [#allocation5], 2048
    $region57: #{multihead_forward.1} parent=1 // pred_fallthru
      _
    // Predicated region
    $region58: #{multihead_forward.1} parent=1 // pred_check
      _
    $region59: #{multihead_forward.1} parent=1 // pred_check_branch
      %85 = sbr.rel (0) target = $region61
    $region60: #{multihead_forward.1} parent=1 // pred_region
      %87 = dma.done [#allocation5], 2560
    $region61: #{multihead_forward.1} parent=1 // pred_fallthru
      _
    %v89 = vld [vmem:[%s1] sm:$0xf]
    %v90 = vld [vmem:[#allocation2] sm:$0xff]
    %v91 = vld [vmem:[#allocation2 + $0x8] sm:$0xff]
    %v92 = vld [vmem:[#allocation2 + $0x10] sm:$0xff]
    %v93 = vld [vmem:[#allocation2 + $0x18] sm:$0xff]
    %v94 = vld [vmem:[%s3] sm:$0x3]
    %v96 = vperm.slane %v94, 0
    %v97 = vperm.slane %v94, 1
    %v104 = vunpack.c.l.b16 %v90
    %v105 = vunpack.c.h.b16 %v90
    %v106 = vunpack.c.l.b16 %v91
    %v107 = vunpack.c.h.b16 %v91
    %v108 = vunpack.c.l.b16 %v92
    %v109 = vunpack.c.h.b16 %v92
    %v110 = vunpack.c.l.b16 %v93
    %v111 = vunpack.c.h.b16 %v93
    %v112 = vpack.c.b16 %v106, %v104
    %v113 = vpack.c.b16 %v107, %v105
    %v114 = vpack.c.b16 %v110, %v108
    %v115 = vpack.c.b16 %v111, %v109
    %vm120 = vcmask 261120
    %v122 = vsel %vm120, %v89, 0
    %124 = vmatpush.bf16.msra.mxu0 0
    %125 = vmatpush.bf16.msra.mxu0 0
    %126 = vmatpush.bf16.msra.mxu0 0
    %127 = vmatpush.bf16.msra.mxu0 0
    %128 = vmatpush.bf16.msra.mxu0 0
    %129 = vmatpush.bf16.msra.mxu0 0
    %130 = vmatpush.bf16.msra.mxu0 %v114
    %131 = vmatpush.bf16.msra.mxu0 %v112
    %132 = vmatmul.bf16.gmra.mxu0 %v122
    %v133 = vpop.f32.mrf.mxu0
    %v134 = vadd.f32 %v96, %v133
    %v135 = vpop.f32.mrf.mxu0
    %136 = vdwg.mxu0
    %137 = vmatpush.bf16.msra.mxu0 0
    %138 = vmatpush.bf16.msra.mxu0 0
    %139 = vmatpush.bf16.msra.mxu0 0
    %140 = vmatpush.bf16.msra.mxu0 0
    %141 = vmatpush.bf16.msra.mxu0 0
    %142 = vmatpush.bf16.msra.mxu0 0
    %143 = vmatpush.bf16.msra.mxu0 %v115
    %144 = vmatpush.bf16.msra.mxu0 %v113
    %145 = vmatmul.bf16.gmra.mxu0 %v122
    %v146 = vpop.f32.mrf.mxu0
    %v147 = vadd.f32 %v97, %v146
    %v148 = vpop.f32.mrf.mxu0
    %149 = vdwg.mxu0
    %v150 = vmax.f32 %v134, 0.0
    %v151 = vmax.f32 %v147, 0.0
    %v152 = vpack.c.bf16 %v150, %v150
    %v153 = vpack.c.bf16 %v151, %v151
    %v154 = vld [vmem:[#allocation4] sm:$0xf]
    %v155 = vld [vmem:[#allocation4 + $0x4] sm:$0xf]
    %v156 = vld [vmem:[#allocation4 + $0x8] sm:$0xf]
    %v157 = vld [vmem:[#allocation4 + $0xc] sm:$0xf]
    %v158 = vld [vmem:[#allocation4 + $0x10] sm:$0xf]
    %v159 = vld [vmem:[#allocation4 + $0x14] sm:$0xf]
    %v160 = vld [vmem:[#allocation4 + $0x18] sm:$0xf]
    %v161 = vld [vmem:[#allocation4 + $0x1c] sm:$0xf]
    %v162 = vld [vmem:[#allocation4 + $0x20] sm:$0xf]
    %v163 = vld [vmem:[#allocation4 + $0x24] sm:$0xf]
    %v164 = vld [vmem:[#allocation4 + $0x28] sm:$0xf]
    %v165 = vld [vmem:[#allocation4 + $0x2c] sm:$0xf]
    %v166 = vld [vmem:[#allocation4 + $0x30] sm:$0xf]
    %v167 = vld [vmem:[#allocation4 + $0x34] sm:$0xf]
    %v168 = vld [vmem:[#allocation4 + $0x38] sm:$0xf]
    %v169 = vld [vmem:[#allocation4 + $0x3c] sm:$0xf]
    %v170 = vld [vmem:[#allocation4 + $0x40] sm:$0xf]
    %v171 = vld [vmem:[#allocation4 + $0x44] sm:$0xf]
    %v172 = vld [vmem:[#allocation4 + $0x48] sm:$0xf]
    %v173 = vld [vmem:[#allocation4 + $0x4c] sm:$0xf]
    %v174 = vld [vmem:[#allocation4 + $0x50] sm:$0xf]
    %v175 = vld [vmem:[#allocation4 + $0x54] sm:$0xf]
    %v176 = vld [vmem:[#allocation4 + $0x58] sm:$0xf]
    %v177 = vld [vmem:[#allocation4 + $0x5c] sm:$0xf]
    %v178 = vld [vmem:[#allocation4 + $0x60] sm:$0xf]
    %v179 = vld [vmem:[#allocation4 + $0x64] sm:$0xf]
    %v180 = vld [vmem:[#allocation4 + $0x68] sm:$0xf]
    %v181 = vld [vmem:[#allocation4 + $0x6c] sm:$0xf]
    %v182 = vld [vmem:[#allocation4 + $0x70] sm:$0xf]
    %v183 = vld [vmem:[#allocation4 + $0x74] sm:$0xf]
    %v184 = vld [vmem:[#allocation4 + $0x78] sm:$0xf]
    %v185 = vld [vmem:[#allocation4 + $0x7c] sm:$0xf]
    %v186 = vld [vmem:[%s5] sm:$0x1]
    %v188 = vperm.slane %v186, 0
    %v222 = vunpack.c.l.b16 %v154
    %v223 = vunpack.c.l.b16 %v155
    %v224 = vunpack.c.l.b16 %v156
    %v225 = vunpack.c.l.b16 %v157
    %v226 = vunpack.c.l.b16 %v158
    %v227 = vunpack.c.l.b16 %v159
    %v228 = vunpack.c.l.b16 %v160
    %v229 = vunpack.c.l.b16 %v161
    %v230 = vunpack.c.l.b16 %v162
    %v231 = vunpack.c.l.b16 %v163
    %v232 = vunpack.c.l.b16 %v164
    %v233 = vunpack.c.l.b16 %v165
    %v234 = vunpack.c.l.b16 %v166
    %v235 = vunpack.c.l.b16 %v167
    %v236 = vunpack.c.l.b16 %v168
    %v237 = vunpack.c.l.b16 %v169
    %v238 = vunpack.c.l.b16 %v170
    %v239 = vunpack.c.l.b16 %v171
    %v240 = vunpack.c.l.b16 %v172
    %v241 = vunpack.c.l.b16 %v173
    %v242 = vunpack.c.l.b16 %v174
    %v243 = vunpack.c.l.b16 %v175
    %v244 = vunpack.c.l.b16 %v176
    %v245 = vunpack.c.l.b16 %v177
    %v246 = vunpack.c.l.b16 %v178
    %v247 = vunpack.c.l.b16 %v179
    %v248 = vunpack.c.l.b16 %v180
    %v249 = vunpack.c.l.b16 %v181
    %v250 = vunpack.c.l.b16 %v182
    %v251 = vunpack.c.l.b16 %v183
    %v252 = vunpack.c.l.b16 %v184
    %v253 = vunpack.c.l.b16 %v185
    %v254 = vpack.c.b16 %v223, %v222
    %v255 = vpack.c.b16 %v225, %v224
    %v256 = vpack.c.b16 %v227, %v226
    %v257 = vpack.c.b16 %v229, %v228
    %v258 = vpack.c.b16 %v231, %v230
    %v259 = vpack.c.b16 %v233, %v232
    %v260 = vpack.c.b16 %v235, %v234
    %v261 = vpack.c.b16 %v237, %v236
    %v262 = vpack.c.b16 %v239, %v238
    %v263 = vpack.c.b16 %v241, %v240
    %v264 = vpack.c.b16 %v243, %v242
    %v265 = vpack.c.b16 %v245, %v244
    %v266 = vpack.c.b16 %v247, %v246
    %v267 = vpack.c.b16 %v249, %v248
    %v268 = vpack.c.b16 %v251, %v250
    %v269 = vpack.c.b16 %v253, %v252
    %286 = vmatpush.bf16.msra.mxu0 %v261
    %287 = vmatpush.bf16.msra.mxu0 %v260
    %288 = vmatpush.bf16.msra.mxu0 %v259
    %289 = vmatpush.bf16.msra.mxu0 %v258
    %290 = vmatpush.bf16.msra.mxu0 %v257
    %291 = vmatpush.bf16.msra.mxu0 %v256
    %292 = vmatpush.bf16.msra.mxu0 %v255
    %293 = vmatpush.bf16.msra.mxu0 %v254
    %294 = vmatmul.bf16.gmra.mxu0 %v152
    %v295 = vpop.f32.mrf.mxu0
    %v296 = vadd.f32 %v188, %v295
    %v297 = vpop.f32.mrf.mxu0
    %298 = vdwg.mxu0
    %299 = vmatpush.bf16.msra.mxu0 %v269
    %300 = vmatpush.bf16.msra.mxu0 %v268
    %301 = vmatpush.bf16.msra.mxu0 %v267
    %302 = vmatpush.bf16.msra.mxu0 %v266
    %303 = vmatpush.bf16.msra.mxu0 %v265
    %304 = vmatpush.bf16.msra.mxu0 %v264
    %305 = vmatpush.bf16.msra.mxu0 %v263
    %306 = vmatpush.bf16.msra.mxu0 %v262
    %307 = vmatmul.bf16.gmra.mxu0 %v153
    %v308 = vpop.f32.mrf.mxu0
    %v309 = vadd.f32 %v296, %v308
    %v310 = vpop.f32.mrf.mxu0
    %311 = vdwg.mxu0
    %v312 = vmax.f32 %v309, 0.0
    %v313 = vpack.c.bf16 %v312, %v312
    %v314 = vld [vmem:[%s6] sm:$0xf]
    %v315 = vld [vmem:[%s6 + $0x4] sm:$0xf]
    %v316 = vld [vmem:[%s6 + $0x8] sm:$0xf]
    %v317 = vld [vmem:[%s6 + $0xc] sm:$0xf]
    %v318 = vld [vmem:[%s6 + $0x10] sm:$0xf]
    %v319 = vld [vmem:[%s6 + $0x14] sm:$0xf]
    %v320 = vld [vmem:[%s6 + $0x18] sm:$0xf]
    %v321 = vld [vmem:[%s6 + $0x1c] sm:$0xf]
    %v322 = vld [vmem:[%s6 + $0x20] sm:$0xf]
    %v323 = vld [vmem:[%s6 + $0x24] sm:$0xf]
    %v324 = vld [vmem:[%s6 + $0x28] sm:$0xf]
    %v325 = vld [vmem:[%s6 + $0x2c] sm:$0xf]
    %v326 = vld [vmem:[%s6 + $0x30] sm:$0xf]
    %v327 = vld [vmem:[%s6 + $0x34] sm:$0xf]
    %v328 = vld [vmem:[%s6 + $0x38] sm:$0xf]
    %v329 = vld [vmem:[%s6 + $0x3c] sm:$0xf]
    %v330 = vld [vmem:[%s7] sm:$0x1]
    %v332 = vperm.slane %v330, 0
    %v350 = vunpack.c.l.b16 %v314
    %v351 = vunpack.c.l.b16 %v315
    %v352 = vunpack.c.l.b16 %v316
    %v353 = vunpack.c.l.b16 %v317
    %v354 = vunpack.c.l.b16 %v318
    %v355 = vunpack.c.l.b16 %v319
    %v356 = vunpack.c.l.b16 %v320
    %v357 = vunpack.c.l.b16 %v321
    %v358 = vunpack.c.l.b16 %v322
    %v359 = vunpack.c.l.b16 %v323
    %v360 = vunpack.c.l.b16 %v324
    %v361 = vunpack.c.l.b16 %v325
    %v362 = vunpack.c.l.b16 %v326
    %v363 = vunpack.c.l.b16 %v327
    %v364 = vunpack.c.l.b16 %v328
    %v365 = vunpack.c.l.b16 %v329
    %v366 = vpack.c.b16 %v351, %v350
    %v367 = vpack.c.b16 %v353, %v352
    %v368 = vpack.c.b16 %v355, %v354
    %v369 = vpack.c.b16 %v357, %v356
    %v370 = vpack.c.b16 %v359, %v358
    %v371 = vpack.c.b16 %v361, %v360
    %v372 = vpack.c.b16 %v363, %v362
    %v373 = vpack.c.b16 %v365, %v364
    %382 = vmatpush.bf16.msra.mxu0 %v373
    %383 = vmatpush.bf16.msra.mxu0 %v372
    %384 = vmatpush.bf16.msra.mxu0 %v371
    %385 = vmatpush.bf16.msra.mxu0 %v370
    %386 = vmatpush.bf16.msra.mxu0 %v369
    %387 = vmatpush.bf16.msra.mxu0 %v368
    %388 = vmatpush.bf16.msra.mxu0 %v367
    %389 = vmatpush.bf16.msra.mxu0 %v366
    %390 = vmatmul.bf16.gmra.mxu0 %v313
    %v391 = vpop.f32.mrf.mxu0
    %v392 = vadd.f32 %v332, %v391
    %v393 = vpop.f32.mrf.mxu0
    %394 = vdwg.mxu0
    %v395 = vmax.f32 %v392, 0.0
    %v396 = vpack.c.bf16 %v395, %v395
    %v397 = vld [vmem:[%s8] sm:$0xff]
    %v398 = vld [vmem:[%s8 + $0x8] sm:$0xf]
    %v399 = vld [vmem:[%s8 + $0xc] sm:$0xff]
    %v400 = vld [vmem:[%s8 + $0x14] sm:$0xf]
    %v401 = vld [vmem:[%s8 + $0x18] sm:$0xff]
    %v402 = vld [vmem:[%s8 + $0x20] sm:$0xf]
    %v403 = vld [vmem:[%s8 + $0x24] sm:$0xff]
    %v404 = vld [vmem:[%s8 + $0x2c] sm:$0xf]
    %v405 = vld [vmem:[%s8 + $0x30] sm:$0xff]
    %v406 = vld [vmem:[%s8 + $0x38] sm:$0xf]
    %v407 = vld [vmem:[%s8 + $0x3c] sm:$0xff]
    %v408 = vld [vmem:[%s8 + $0x44] sm:$0xf]
    %v409 = vld [vmem:[%s8 + $0x48] sm:$0xff]
    %v410 = vld [vmem:[%s8 + $0x50] sm:$0xf]
    %v411 = vld [vmem:[%s8 + $0x54] sm:$0xff]
    %v412 = vld [vmem:[%s8 + $0x5c] sm:$0xf]
    %v413 = vld [vmem:[%s9] sm:$0x7]
    %v415 = vperm.slane %v413, 0
    %v416 = vperm.slane %v413, 1
    %v417 = vperm.slane %v413, 2
    %v437 = vunpack.c.l.b16 %v397
    %v438 = vunpack.c.h.b16 %v397
    %v439 = vunpack.c.l.b16 %v398
    %v440 = vunpack.c.l.b16 %v399
    %v441 = vunpack.c.h.b16 %v399
    %v442 = vunpack.c.l.b16 %v400
    %v443 = vunpack.c.l.b16 %v401
    %v444 = vunpack.c.h.b16 %v401
    %v445 = vunpack.c.l.b16 %v402
    %v446 = vunpack.c.l.b16 %v403
    %v447 = vunpack.c.h.b16 %v403
    %v448 = vunpack.c.l.b16 %v404
    %v449 = vunpack.c.l.b16 %v405
    %v450 = vunpack.c.h.b16 %v405
    %v451 = vunpack.c.l.b16 %v406
    %v452 = vunpack.c.l.b16 %v407
    %v453 = vunpack.c.h.b16 %v407
    %v454 = vunpack.c.l.b16 %v408
    %v455 = vunpack.c.l.b16 %v409
    %v456 = vunpack.c.h.b16 %v409
    %v457 = vunpack.c.l.b16 %v410
    %v458 = vunpack.c.l.b16 %v411
    %v459 = vunpack.c.h.b16 %v411
    %v460 = vunpack.c.l.b16 %v412
    %v461 = vpack.c.b16 %v440, %v437
    %v462 = vpack.c.b16 %v441, %v438
    %v463 = vpack.c.b16 %v442, %v439
    %v464 = vpack.c.b16 %v446, %v443
    %v465 = vpack.c.b16 %v447, %v444
    %v466 = vpack.c.b16 %v448, %v445
    %v467 = vpack.c.b16 %v452, %v449
    %v468 = vpack.c.b16 %v453, %v450
    %v469 = vpack.c.b16 %v454, %v451
    %v470 = vpack.c.b16 %v458, %v455
    %v471 = vpack.c.b16 %v459, %v456
    %v472 = vpack.c.b16 %v460, %v457
    %vm485 = vcmask 523264
    %v487 = vsel %vm485, %v396, 0
    %489 = vmatpush.bf16.msra.mxu0 0
    %490 = vmatpush.bf16.msra.mxu0 0
    %491 = vmatpush.bf16.msra.mxu0 0
    %492 = vmatpush.bf16.msra.mxu0 0
    %493 = vmatpush.bf16.msra.mxu0 %v470
    %494 = vmatpush.bf16.msra.mxu0 %v467
    %495 = vmatpush.bf16.msra.mxu0 %v464
    %496 = vmatpush.bf16.msra.mxu0 %v461
    %497 = vmatmul.bf16.gmra.mxu0 %v487
    %v498 = vpop.f32.mrf.mxu0
    %v499 = vadd.f32 %v415, %v498
    %v500 = vpop.f32.mrf.mxu0
    %501 = vdwg.mxu0
    %502 = vmatpush.bf16.msra.mxu0 0
    %503 = vmatpush.bf16.msra.mxu0 0
    %504 = vmatpush.bf16.msra.mxu0 0
    %505 = vmatpush.bf16.msra.mxu0 0
    %506 = vmatpush.bf16.msra.mxu0 %v471
    %507 = vmatpush.bf16.msra.mxu0 %v468
    %508 = vmatpush.bf16.msra.mxu0 %v465
    %509 = vmatpush.bf16.msra.mxu0 %v462
    %510 = vmatmul.bf16.gmra.mxu0 %v487
    %v511 = vpop.f32.mrf.mxu0
    %v512 = vadd.f32 %v416, %v511
    %v513 = vpop.f32.mrf.mxu0
    %514 = vdwg.mxu0
    %515 = vmatpush.bf16.msra.mxu0 0
    %516 = vmatpush.bf16.msra.mxu0 0
    %517 = vmatpush.bf16.msra.mxu0 0
    %518 = vmatpush.bf16.msra.mxu0 0
    %519 = vmatpush.bf16.msra.mxu0 %v472
    %520 = vmatpush.bf16.msra.mxu0 %v469
    %521 = vmatpush.bf16.msra.mxu0 %v466
    %522 = vmatpush.bf16.msra.mxu0 %v463
    %523 = vmatmul.bf16.gmra.mxu0 %v487
    %v524 = vpop.f32.mrf.mxu0
    %v525 = vadd.f32 %v417, %v524
    %v526 = vpop.f32.mrf.mxu0
    %527 = vdwg.mxu0
    %v528 = vmax.f32 %v499, 0.0
    %v529 = vmax.f32 %v512, 0.0
    %v530 = vmax.f32 %v525, 0.0
    %v531 = vpack.c.bf16 %v528, %v528
    %v532 = vpack.c.bf16 %v529, %v529
    %v533 = vpack.c.bf16 %v530, %v530
    %v534 = vld [vmem:[#allocation6] sm:$0xf]
    %v535 = vld [vmem:[#allocation6 + $0x4] sm:$0xf]
    %v536 = vld [vmem:[#allocation6 + $0x8] sm:$0xf]
    %v537 = vld [vmem:[#allocation6 + $0xc] sm:$0xf]
    %v538 = vld [vmem:[#allocation6 + $0x10] sm:$0xf]
    %v539 = vld [vmem:[#allocation6 + $0x14] sm:$0xf]
    %v540 = vld [vmem:[#allocation6 + $0x18] sm:$0xf]
    %v541 = vld [vmem:[#allocation6 + $0x1c] sm:$0xf]
    %v542 = vld [vmem:[#allocation6 + $0x20] sm:$0xf]
    %v543 = vld [vmem:[#allocation6 + $0x24] sm:$0xf]
    %v544 = vld [vmem:[#allocation6 + $0x28] sm:$0xf]
    %v545 = vld [vmem:[#allocation6 + $0x2c] sm:$0xf]
    %v546 = vld [vmem:[#allocation6 + $0x30] sm:$0xf]
    %v547 = vld [vmem:[#allocation6 + $0x34] sm:$0xf]
    %v548 = vld [vmem:[#allocation6 + $0x38] sm:$0xf]
    %v549 = vld [vmem:[#allocation6 + $0x3c] sm:$0xf]
    %v550 = vld [vmem:[#allocation6 + $0x40] sm:$0xf]
    %v551 = vld [vmem:[#allocation6 + $0x44] sm:$0xf]
    %v552 = vld [vmem:[#allocation6 + $0x48] sm:$0xf]
    %v553 = vld [vmem:[#allocation6 + $0x4c] sm:$0xf]
    %v554 = vld [vmem:[#allocation6 + $0x50] sm:$0xf]
    %v555 = vld [vmem:[#allocation6 + $0x54] sm:$0xf]
    %v556 = vld [vmem:[#allocation6 + $0x58] sm:$0xf]
    %v557 = vld [vmem:[#allocation6 + $0x5c] sm:$0xf]
    %v558 = vld [vmem:[#allocation6 + $0x60] sm:$0xf]
    %v559 = vld [vmem:[#allocation6 + $0x64] sm:$0xf]
    %v560 = vld [vmem:[#allocation6 + $0x68] sm:$0xf]
    %v561 = vld [vmem:[#allocation6 + $0x6c] sm:$0xf]
    %v562 = vld [vmem:[#allocation6 + $0x70] sm:$0xf]
    %v563 = vld [vmem:[#allocation6 + $0x74] sm:$0xf]
    %v564 = vld [vmem:[#allocation6 + $0x78] sm:$0xf]
    %v565 = vld [vmem:[#allocation6 + $0x7c] sm:$0xf]
    %v566 = vld [vmem:[#allocation6 + $0x80] sm:$0xf]
    %v567 = vld [vmem:[#allocation6 + $0x84] sm:$0xf]
    %v568 = vld [vmem:[#allocation6 + $0x88] sm:$0xf]
    %v569 = vld [vmem:[#allocation6 + $0x8c] sm:$0xf]
    %v570 = vld [vmem:[#allocation6 + $0x90] sm:$0xf]
    %v571 = vld [vmem:[#allocation6 + $0x94] sm:$0xf]
    %v572 = vld [vmem:[#allocation6 + $0x98] sm:$0xf]
    %v573 = vld [vmem:[#allocation6 + $0x9c] sm:$0xf]
    %v574 = vld [vmem:[%s11] sm:$0x1]
    %v576 = vperm.slane %v574, 0
    %v618 = vunpack.c.l.b16 %v534
    %v619 = vunpack.c.l.b16 %v535
    %v620 = vunpack.c.l.b16 %v536
    %v621 = vunpack.c.l.b16 %v537
    %v622 = vunpack.c.l.b16 %v538
    %v623 = vunpack.c.l.b16 %v539
    %v624 = vunpack.c.l.b16 %v540
    %v625 = vunpack.c.l.b16 %v541
    %v626 = vunpack.c.l.b16 %v542
    %v627 = vunpack.c.l.b16 %v543
    %v628 = vunpack.c.l.b16 %v544
    %v629 = vunpack.c.l.b16 %v545
    %v630 = vunpack.c.l.b16 %v546
    %v631 = vunpack.c.l.b16 %v547
    %v632 = vunpack.c.l.b16 %v548
    %v633 = vunpack.c.l.b16 %v549
    %v634 = vunpack.c.l.b16 %v550
    %v635 = vunpack.c.l.b16 %v551
    %v636 = vunpack.c.l.b16 %v552
    %v637 = vunpack.c.l.b16 %v553
    %v638 = vunpack.c.l.b16 %v554
    %v639 = vunpack.c.l.b16 %v555
    %v640 = vunpack.c.l.b16 %v556
    %v641 = vunpack.c.l.b16 %v557
    %v642 = vunpack.c.l.b16 %v558
    %v643 = vunpack.c.l.b16 %v559
    %v644 = vunpack.c.l.b16 %v560
    %v645 = vunpack.c.l.b16 %v561
    %v646 = vunpack.c.l.b16 %v562
    %v647 = vunpack.c.l.b16 %v563
    %v648 = vunpack.c.l.b16 %v564
    %v649 = vunpack.c.l.b16 %v565
    %v650 = vunpack.c.l.b16 %v566
    %v651 = vunpack.c.l.b16 %v567
    %v652 = vunpack.c.l.b16 %v568
    %v653 = vunpack.c.l.b16 %v569
    %v654 = vunpack.c.l.b16 %v570
    %v655 = vunpack.c.l.b16 %v571
    %v656 = vunpack.c.l.b16 %v572
    %v657 = vunpack.c.l.b16 %v573
    %v658 = vpack.c.b16 %v619, %v618
    %v659 = vpack.c.b16 %v621, %v620
    %v660 = vpack.c.b16 %v623, %v622
    %v661 = vpack.c.b16 %v625, %v624
    %v662 = vpack.c.b16 %v627, %v626
    %v663 = vpack.c.b16 %v629, %v628
    %v664 = vpack.c.b16 %v631, %v630
    %v665 = vpack.c.b16 %v633, %v632
    %v666 = vpack.c.b16 %v635, %v634
    %v667 = vpack.c.b16 %v637, %v636
    %v668 = vpack.c.b16 %v639, %v638
    %v669 = vpack.c.b16 %v641, %v640
    %v670 = vpack.c.b16 %v643, %v642
    %v671 = vpack.c.b16 %v645, %v644
    %v672 = vpack.c.b16 %v647, %v646
    %v673 = vpack.c.b16 %v649, %v648
    %v674 = vpack.c.b16 %v651, %v650
    %v675 = vpack.c.b16 %v653, %v652
    %v676 = vpack.c.b16 %v655, %v654
    %v677 = vpack.c.b16 %v657, %v656
    %v699 = vsel %vm485, %v533, 0
    %701 = vmatpush.bf16.msra.mxu0 %v665
    %702 = vmatpush.bf16.msra.mxu0 %v664
    %703 = vmatpush.bf16.msra.mxu0 %v663
    %704 = vmatpush.bf16.msra.mxu0 %v662
    %705 = vmatpush.bf16.msra.mxu0 %v661
    %706 = vmatpush.bf16.msra.mxu0 %v660
    %707 = vmatpush.bf16.msra.mxu0 %v659
    %708 = vmatpush.bf16.msra.mxu0 %v658
    %709 = vmatmul.bf16.gmra.mxu0 %v531
    %v710 = vpop.f32.mrf.mxu0
    %v711 = vadd.f32 %v576, %v710
    %v712 = vpop.f32.mrf.mxu0
    %713 = vdwg.mxu0
    %714 = vmatpush.bf16.msra.mxu0 %v673
    %715 = vmatpush.bf16.msra.mxu0 %v672
    %716 = vmatpush.bf16.msra.mxu0 %v671
    %717 = vmatpush.bf16.msra.mxu0 %v670
    %718 = vmatpush.bf16.msra.mxu0 %v669
    %719 = vmatpush.bf16.msra.mxu0 %v668
    %720 = vmatpush.bf16.msra.mxu0 %v667
    %721 = vmatpush.bf16.msra.mxu0 %v666
    %722 = vmatmul.bf16.gmra.mxu0 %v532
    %v723 = vpop.f32.mrf.mxu0
    %v724 = vadd.f32 %v711, %v723
    %v725 = vpop.f32.mrf.mxu0
    %726 = vdwg.mxu0
    %727 = vmatpush.bf16.msra.mxu0 0
    %728 = vmatpush.bf16.msra.mxu0 0
    %729 = vmatpush.bf16.msra.mxu0 0
    %730 = vmatpush.bf16.msra.mxu0 0
    %731 = vmatpush.bf16.msra.mxu0 %v677
    %732 = vmatpush.bf16.msra.mxu0 %v676
    %733 = vmatpush.bf16.msra.mxu0 %v675
    %734 = vmatpush.bf16.msra.mxu0 %v674
    %735 = vmatmul.bf16.gmra.mxu0 %v699
    %v736 = vpop.f32.mrf.mxu0
    %v737 = vadd.f32 %v724, %v736
    %v738 = vpop.f32.mrf.mxu0
    %739 = vdwg.mxu0
    %v740 = vld [vmem:[%s0] sm:$0x1]
    %vm741 = vcmp.eq.s32.totalorder %v740, 1
    %vm742 = vcmp.eq.s32.totalorder %v740, 2
    %vm743 = vcmp.eq.s32.totalorder %v740, 3
    %vm744 = vcmp.ge.s32.totalorder %v740, 2
    %v745 = vsel %vm742, 1, 0
    %v746 = vperm.slane %v745, 0
    %vm747 = vcmp.eq.s32.totalorder %v746, 1
    %v748 = vsel %vm747, %v737, -inf
    %749 = vmax.xlane.f32.xlu0 %v748
    %v750 = vpop.xlane.xlu0 %749
    %v751 = vsel %vm743, 1, 0
    %v752 = vperm.slane %v751, 0
    %vm753 = vcmp.eq.s32.totalorder %v752, 1
    %v754 = vsel %vm753, %v737, -inf
    %755 = vmax.xlane.f32.xlu0 %v754
    %v756 = vpop.xlane.xlu0 %755
    %v757 = vsel %vm753, %v756, 0.0
    %v758 = vsel %vm747, %v750, %v757
    %v759 = vsub.f32 %v737, %v758
    %v760 = vmin.f32 %v759, 30.0
    %v761 = vmul.f32 %v760, 1.442695
    %v762 = vpow.pop %v761
    %v763 = vsel %vm747, %v762, 0.0
    %764 = vadd.xlane.f32.xlu0 %v763
    %v765 = vpop.xlane.xlu0 %764
    %v766 = vsel %vm753, %v762, 0.0
    %767 = vadd.xlane.f32.xlu0 %v766
    %v768 = vpop.xlane.xlu0 %767
    %v769 = vrcp.pop %v765
    %v770 = vmul.f32 %v765, %v769
    %v771 = vsub.f32 1.0, %v770
    %v772 = vmul.f32 %v769, %v771
    %v773 = vadd.f32 %v769, %v772
    %vm774 = vweird.f32 %v765
    %vm775 = vweird.f32 %v769
    %vm776 = vmor %vm774, %vm775
    %v777 = vsel %vm776, %v769, %v773
    %v778 = vand.u32 2147483647, %v765
    %vm779 = vcmp.eq.f32.partialorder %v778, 8.507059e+37
    %v780 = vand.u32 %v765, 2147483648
    %v781 = vor.u32 1.1754944e-38, %v780
    %v782 = vsel %vm779, %v781, %v777
    %v783 = vmul.f32 1.0, %v782
    %v784 = vrcp.pop %v768
    %v785 = vmul.f32 %v768, %v784
    %v786 = vsub.f32 1.0, %v785
    %v787 = vmul.f32 %v784, %v786
    %v788 = vadd.f32 %v784, %v787
    %vm789 = vweird.f32 %v768
    %vm790 = vweird.f32 %v784
    %vm791 = vmor %vm789, %vm790
    %v792 = vsel %vm791, %v784, %v788
    %v793 = vand.u32 2147483647, %v768
    %vm794 = vcmp.eq.f32.partialorder %v793, 8.507059e+37
    %v795 = vand.u32 %v768, 2147483648
    %v796 = vor.u32 1.1754944e-38, %v795
    %v797 = vsel %vm794, %v796, %v792
    %v798 = vmul.f32 1.0, %v797
    %v799 = vsel %vm753, %v798, 0.0
    %v800 = vsel %vm747, %v783, %v799
    %v801 = vmul.f32 %v762, %v800
    %v802 = vadd.f32 %v762, 1.0
    %v803 = vrcp.pop %v802
    %v804 = vmul.f32 %v762, %v803
    %v805 = vsel %vm744, 1, 0
    %v806 = vperm.slane %v805, 0
    %vm807 = vcmp.eq.s32.totalorder %v806, 1
    %v808 = vsel %vm807, %v801, %v737
    %v809 = vsel %vm741, 1, 0
    %v810 = vperm.slane %v809, 0
    %vm811 = vcmp.eq.s32.totalorder %v810, 1
    %v812 = vsel %vm811, %v804, %v808
    %v813 = vpack.c.bf16 %v812, %v812
    %814 = vst [vmem:[%s12] sm:$0xf] %v813
    // Predicated region
    $region62: #{multihead_forward.1} parent=1 // pred_check
      _
    $region63: #{multihead_forward.1} parent=1 // pred_check_branch
      %816 = sbr.rel (0) target = $region65
    $region64: #{multihead_forward.1} parent=1 // pred_region
      _
    $region65: #{multihead_forward.1} parent=1 // pred_fallthru
      _
    // Predicated region
    $region66: #{multihead_forward.1} parent=1 // pred_check
      _
    $region67: #{multihead_forward.1} parent=1 // pred_check_branch
      %818 = sbr.rel (0) target = $region69
    $region68: #{multihead_forward.1} parent=1 // pred_region
      _
    $region69: #{multihead_forward.1} parent=1 // pred_fallthru
      _
    %819 = vsyncpa [#allocation3], 1
    %820 = vsyncpa [#allocation5], 1

</llo_original>
